<compile_context>
chip_gen: v7x
topology: tpu7x:2x2x1
jax: 0.10.0
libtpu: 0.0.40
codegen_flags: <defaults>
</compile_context>

<pallas_src>
import jax
import jax.numpy as jnp
from jax import lax
from jax.experimental import pallas as pl
from jax.experimental.pallas import tpu as pltpu

EPS = 1e-8  # same default as torch.nn.functional.cosine_similarity


def _dual_input_kernel(x1_ref, x2_ref, w1_ref, b1_ref, w2_ref, b2_ref, out_ref):
    # Linear 1: (TB, D1) contracted with (H, D1) on D1 -> (TB, H).  Weights are
    # kept in their native (H, D) layout; dot_general with trans-B is the
    # standard MXU x @ w.T pattern (no wrapper-side transpose needed).
    out1 = lax.dot_general(
        x1_ref[...], w1_ref[...],
        dimension_numbers=(((1,), (1,)), ((), ())),
        preferred_element_type=jnp.float32,
    ) + b1_ref[...]                                   # (TB, H) + (1, H)

    # Linear 2: (TB, D2) x (H, D2)^T -> (TB, H)
    out2 = lax.dot_general(
        x2_ref[...], w2_ref[...],
        dimension_numbers=(((1,), (1,)), ((), ())),
        preferred_element_type=jnp.float32,
    ) + b2_ref[...]

    # Cosine similarity along the hidden dim (all f32, VPU + one EUP rsqrt).
    dot = jnp.sum(out1 * out2, axis=-1)               # (TB,)
    s1 = jnp.sum(out1 * out1, axis=-1)                # squared norms, (TB,)
    s2 = jnp.sum(out2 * out2, axis=-1)
    # torch clamps each norm: dot / (max(n1,eps)*max(n2,eps)).  Norms are
    # nonnegative, so max(n,eps)^2 == max(n^2, eps^2) and one fused rsqrt
    # replaces two sqrts + a divide.
    denom = jnp.maximum(s1, EPS * EPS) * jnp.maximum(s2, EPS * EPS)
    sim = dot * lax.rsqrt(denom)

    out_ref[0, :] = sim.astype(out_ref.dtype)         # lane-dense (1, TB) slab


def _choose_tb(B):
    """Batch tile size.

    Either a multiple of 128 that divides B (so the (TB, D) input blocks and
    the lane-dense (1, TB) output block are both legal and the pipeline gets
    several grid steps to overlap DMA with compute), or the whole batch when B
    is small / has no such divisor (full-extent blocks are always legal).
    512 rows keeps the double-buffered activation tiles + resident f32 weight
    slabs comfortably under v7x's 64 MiB VMEM for any reasonable D/H.
    """
    for tb in (512, 256, 128):
        if B % tb == 0:
            return tb
    return B


def dual_input_forward(x1, x2, w1, b1, w2, b2):
    """x1: (B, D1), x2: (B, D2), w1: (H, D1), b1: (H,), w2: (H, D2), b2: (H,).

    Returns cosine similarity of the two linear projections, shape (B,).
    """
    B, D1 = x1.shape
    _, D2 = x2.shape
    H = w1.shape[0]

    x1 = jnp.asarray(x1, jnp.float32)
    x2 = jnp.asarray(x2, jnp.float32)
    w1 = jnp.asarray(w1, jnp.float32)                  # (H, D1) — no transpose
    w2 = jnp.asarray(w2, jnp.float32)                  # (H, D2) — no transpose
    b1_r = jnp.asarray(b1, jnp.float32).reshape(1, H)  # broadcast rows
    b2_r = jnp.asarray(b2, jnp.float32).reshape(1, H)

    TB = _choose_tb(B)
    grid = (pl.cdiv(B, TB),)

    out = pl.pallas_call(
        _dual_input_kernel,
        out_shape=jax.ShapeDtypeStruct((1, B), jnp.float32),
        grid=grid,
        in_specs=[
            # Streamed activations: new batch tile every grid step.
            pl.BlockSpec((TB, D1), lambda i: (i, 0)),
            pl.BlockSpec((TB, D2), lambda i: (i, 0)),
            # Weights/biases: constant block index -> resident in VMEM.
            pl.BlockSpec((H, D1), lambda i: (0, 0)),
            pl.BlockSpec((1, H), lambda i: (0, 0)),
            pl.BlockSpec((H, D2), lambda i: (0, 0)),
            pl.BlockSpec((1, H), lambda i: (0, 0)),
        ],
        out_specs=pl.BlockSpec((1, TB), lambda i: (0, i)),
        compiler_params=pltpu.CompilerParams(
            # Batch tiles are independent -> shard across TensorCores on v7x.
            dimension_semantics=("parallel",),
        ),
    )(x1, x2, w1, b1_r, w2, b2_r)

    return out.reshape(B)


def _reference(x1, x2, w1, b1, w2, b2):
    out1 = x1 @ w1.T + b1
    out2 = x2 @ w2.T + b2
    dot = jnp.sum(out1 * out2, axis=1)
    n1 = jnp.sqrt(jnp.sum(out1 * out1, axis=1))
    n2 = jnp.sqrt(jnp.sum(out2 * out2, axis=1))
    return dot / (jnp.maximum(n1, EPS) * jnp.maximum(n2, EPS))


if __name__ == "__main__":
    # Small shapes consistent with the module's forward.
    B, D1, D2, H = 8, 16, 24, 32

    key = jax.random.PRNGKey(0)
    k_x1, k_x2, k_w1, k_b1, k_w2, k_b2 = jax.random.split(key, 6)

    x1 = jax.random.normal(k_x1, (B, D1), jnp.float32)
    x2 = jax.random.normal(k_x2, (B, D2), jnp.float32)

    # Deterministic parameter init mimicking nn.Linear's uniform(-1/sqrt(in), 1/sqrt(in)).
    bound1 = 1.0 / (D1 ** 0.5)
    bound2 = 1.0 / (D2 ** 0.5)
    w1 = jax.random.uniform(k_w1, (H, D1), jnp.float32, -bound1, bound1)
    b1 = jax.random.uniform(k_b1, (H,), jnp.float32, -bound1, bound1)
    w2 = jax.random.uniform(k_w2, (H, D2), jnp.float32, -bound2, bound2)
    b2 = jax.random.uniform(k_b2, (H,), jnp.float32, -bound2, bound2)

    fwd = jax.jit(dual_input_forward)
    sim = fwd(x1, x2, w1, b1, w2, b2)
    jax.block_until_ready(sim)

    ref = _reference(x1, x2, w1, b1, w2, b2)
    assert sim.shape == (B,)
    assert jnp.allclose(sim, ref, atol=1e-5, rtol=1e-5), (sim, ref)

    print("KERNEL_OK")
</pallas_src>

<mosaic_0001>
module attributes {stable_mosaic.version = 11 : i64} {
  func.func @_dual_input_kernel(%arg0: i32, %arg1: memref<8x16xf32, #tpu.memory_space<vmem>>, %arg2: memref<8x24xf32, #tpu.memory_space<vmem>>, %arg3: memref<32x16xf32, #tpu.memory_space<vmem>>, %arg4: memref<1x32xf32, #tpu.memory_space<vmem>>, %arg5: memref<32x24xf32, #tpu.memory_space<vmem>>, %arg6: memref<1x32xf32, #tpu.memory_space<vmem>>, %arg7: memref<1x8xf32, #tpu.memory_space<vmem>>) attributes {dimension_semantics = [#tpu.dimension_semantics<parallel>], iteration_bounds = array<i64: 1>, scalar_prefetch = 0 : i64, scratch_operands = 0 : i64, tpu.core_type = #tpu.core_type<tc>, window_params = [{transform_indices = @transform_0, window_bounds = array<i64: 8, 16>}, {transform_indices = @transform_1, window_bounds = array<i64: 8, 24>}, {pipeline_mode = #tpu.pipeline_mode<synchronous>, transform_indices = @transform_2, window_bounds = array<i64: 32, 16>}, {pipeline_mode = #tpu.pipeline_mode<synchronous>, transform_indices = @transform_3, window_bounds = array<i64: 1, 32>}, {pipeline_mode = #tpu.pipeline_mode<synchronous>, transform_indices = @transform_4, window_bounds = array<i64: 32, 24>}, {pipeline_mode = #tpu.pipeline_mode<synchronous>, transform_indices = @transform_5, window_bounds = array<i64: 1, 32>}, {transform_indices = @transform_6, window_bounds = array<i64: 1, 8>}]} {
    %c0 = arith.constant 0 : index
    %c0_0 = arith.constant 0 : index
    %0 = vector.load %arg1[%c0, %c0_0] : memref<8x16xf32, #tpu.memory_space<vmem>>, vector<8x16xf32>
    %c0_1 = arith.constant 0 : index
    %c0_2 = arith.constant 0 : index
    %1 = vector.load %arg3[%c0_1, %c0_2] : memref<32x16xf32, #tpu.memory_space<vmem>>, vector<32x16xf32>
    %cst = arith.constant dense<0.000000e+00> : vector<8x32xf32>
    %2 = tpu.matmul %0, %1, %cst {dimension_numbers = #tpu.dot_dimension_numbers<[1], [1], [0], [0], [0, 0, 1, 0], [], []>} : vector<8x16xf32>, vector<32x16xf32>, vector<8x32xf32> -> vector<8x32xf32>
    %c0_3 = arith.constant 0 : index
    %c0_4 = arith.constant 0 : index
    %3 = vector.load %arg4[%c0_3, %c0_4] : memref<1x32xf32, #tpu.memory_space<vmem>>, vector<1x32xf32>
    %4 = vector.broadcast %3 : vector<1x32xf32> to vector<8x32xf32>
    %5 = arith.addf %2, %4 : vector<8x32xf32>
    %c0_5 = arith.constant 0 : index
    %c0_6 = arith.constant 0 : index
    %6 = vector.load %arg2[%c0_5, %c0_6] : memref<8x24xf32, #tpu.memory_space<vmem>>, vector<8x24xf32>
    %c0_7 = arith.constant 0 : index
    %c0_8 = arith.constant 0 : index
    %7 = vector.load %arg5[%c0_7, %c0_8] : memref<32x24xf32, #tpu.memory_space<vmem>>, vector<32x24xf32>
    %cst_9 = arith.constant dense<0.000000e+00> : vector<8x32xf32>
    %8 = tpu.matmul %6, %7, %cst_9 {dimension_numbers = #tpu.dot_dimension_numbers<[1], [1], [0], [0], [0, 0, 1, 0], [], []>} : vector<8x24xf32>, vector<32x24xf32>, vector<8x32xf32> -> vector<8x32xf32>
    %c0_10 = arith.constant 0 : index
    %c0_11 = arith.constant 0 : index
    %9 = vector.load %arg6[%c0_10, %c0_11] : memref<1x32xf32, #tpu.memory_space<vmem>>, vector<1x32xf32>
    %10 = vector.broadcast %9 : vector<1x32xf32> to vector<8x32xf32>
    %11 = arith.addf %8, %10 : vector<8x32xf32>
    %12 = arith.mulf %5, %11 : vector<8x32xf32>
    %cst_12 = arith.constant dense<0.000000e+00> : vector<8xf32>
    %13 = vector.multi_reduction <add>, %12, %cst_12 [1] : vector<8x32xf32> to vector<8xf32>
    %14 = arith.mulf %5, %5 : vector<8x32xf32>
    %cst_13 = arith.constant dense<0.000000e+00> : vector<8xf32>
    %15 = vector.multi_reduction <add>, %14, %cst_13 [1] : vector<8x32xf32> to vector<8xf32>
    %16 = arith.mulf %11, %11 : vector<8x32xf32>
    %cst_14 = arith.constant dense<0.000000e+00> : vector<8xf32>
    %17 = vector.multi_reduction <add>, %16, %cst_14 [1] : vector<8x32xf32> to vector<8xf32>
    %cst_15 = arith.constant 1.000000e-16 : f32
    %18 = vector.broadcast %cst_15 : f32 to vector<8xf32>
    %19 = arith.maximumf %15, %18 : vector<8xf32>
    %cst_16 = arith.constant 1.000000e-16 : f32
    %20 = vector.broadcast %cst_16 : f32 to vector<8xf32>
    %21 = arith.maximumf %17, %20 : vector<8xf32>
    %22 = arith.mulf %19, %21 : vector<8xf32>
    %23 = math.rsqrt %22 : vector<8xf32>
    %24 = arith.mulf %13, %23 : vector<8xf32>
    %c0_17 = arith.constant 0 : index
    %c0_18 = arith.constant 0 : index
    %25 = vector.load %arg7[%c0_17, %c0_18] : memref<1x8xf32, #tpu.memory_space<vmem>>, vector<1x8xf32>
    %26 = vector.shape_cast %25 : vector<1x8xf32> to vector<8xf32>
    %27 = vector.shape_cast %24 : vector<8xf32> to vector<1x8xf32>
    tpu.vector_store %arg7[%c0_17, %c0_18], %27 {strides = array<i32>} : memref<1x8xf32, #tpu.memory_space<vmem>>, vector<1x8xf32>,
    return
  }
  func.func @transform_0(%arg0: i32) -> (i32, i32) {
    %c0_i32 = arith.constant 0 : i32
    %c0_i32_0 = arith.constant 0 : i32
    return %arg0, %c0_i32 : i32, i32
  }
  func.func @transform_1(%arg0: i32) -> (i32, i32) {
    %c0_i32 = arith.constant 0 : i32
    %c0_i32_0 = arith.constant 0 : i32
    return %arg0, %c0_i32 : i32, i32
  }
  func.func @transform_2(%arg0: i32) -> (i32, i32) {
    %c0_i32 = arith.constant 0 : i32
    %c0_i32_0 = arith.constant 0 : i32
    %c0_i32_1 = arith.constant 0 : i32
    return %c0_i32, %c0_i32_0 : i32, i32
  }
  func.func @transform_3(%arg0: i32) -> (i32, i32) {
    %c0_i32 = arith.constant 0 : i32
    %c0_i32_0 = arith.constant 0 : i32
    %c0_i32_1 = arith.constant 0 : i32
    return %c0_i32, %c0_i32_0 : i32, i32
  }
  func.func @transform_4(%arg0: i32) -> (i32, i32) {
    %c0_i32 = arith.constant 0 : i32
    %c0_i32_0 = arith.constant 0 : i32
    %c0_i32_1 = arith.constant 0 : i32
    return %c0_i32, %c0_i32_0 : i32, i32
  }
  func.func @transform_5(%arg0: i32) -> (i32, i32) {
    %c0_i32 = arith.constant 0 : i32
    %c0_i32_0 = arith.constant 0 : i32
    %c0_i32_1 = arith.constant 0 : i32
    return %c0_i32, %c0_i32_0 : i32, i32
  }
  func.func @transform_6(%arg0: i32) -> (i32, i32) {
    %c0_i32 = arith.constant 0 : i32
    %c0_i32_0 = arith.constant 0 : i32
    return %c0_i32, %arg0 : i32, i32
  }
}

</mosaic_0001>

<llo_original>
// kernel: dual_input_forward.1
$region0: #{dual_input_forward.1}
  #allocation0 [shape = 'u32[]', space=smem, size = 0x4, offset = 0x4, fixed_abs, tag = 'smem constant byte address 0x4 - core index']
  #allocation1 [shape = 'u32[144,128]{1,0:T(1,128)}', space=vmem, size = 0x12000, scoped, tag = 'internal scratch']
  %s0 = inlined_call_operand.vmem [shape: f32[8,16], index: 0, kind: input, shape index: {}]
  %s1 = inlined_call_operand.vmem [shape: f32[8,24], index: 1, kind: input, shape index: {}]
  %s2 = inlined_call_operand.vmem [shape: f32[32,16], index: 2, kind: input, shape index: {}]
  %s3 = inlined_call_operand.vmem [shape: f32[1,32], index: 3, kind: input, shape index: {}]
  %s4 = inlined_call_operand.vmem [shape: f32[32,24], index: 4, kind: input, shape index: {}]
  %s5 = inlined_call_operand.vmem [shape: f32[1,32], index: 5, kind: input, shape index: {}]
  %s6 = inlined_call_operand.hbm [shape: f32[1,8], index: 6, kind: output, shape index: {}]
  %s7 = sld [smem:[#allocation0]]
  $region34: #{dual_input_forward.1} parent=0
    _
  %s9 = ssub.s32 1, %s7
  %s10 = scalar_select 0, %s9, %s7
  $region1: #{dual_input_forward.1} parent=0
    #allocation2 [shape = 'u8[512]{0}', space=vmem, size = 0x400, scoped, tag = 'output window, operand 0, single buffered']
    #allocation3 [shape = 's32[1]{0}', space=sflag, size = 0x4, scoped, tag = 'scoped memory for dual_input_forward.1']
    %11 = vsyncpa [#allocation3], 0
    // Predicated region
    $region2: #{dual_input_forward.1} parent=1 // pred_check
      _
    $region3: #{dual_input_forward.1} parent=1 // pred_check_branch
      %13 = sbr.rel (0) target = $region5
    $region4: #{dual_input_forward.1} parent=1 // pred_region
      _
    $region5: #{dual_input_forward.1} parent=1 // pred_fallthru
      _
    // Predicated region
    $region6: #{dual_input_forward.1} parent=1 // pred_check
      _
    $region7: #{dual_input_forward.1} parent=1 // pred_check_branch
      %15 = sbr.rel (0) target = $region9
    $region8: #{dual_input_forward.1} parent=1 // pred_region
      _
    $region9: #{dual_input_forward.1} parent=1 // pred_fallthru
      _
    // Predicated region
    $region10: #{dual_input_forward.1} parent=1 // pred_check
      _
    $region11: #{dual_input_forward.1} parent=1 // pred_check_branch
      %17 = sbr.rel (0) target = $region13
    $region12: #{dual_input_forward.1} parent=1 // pred_region
      _
    $region13: #{dual_input_forward.1} parent=1 // pred_fallthru
      _
    // Predicated region
    $region14: #{dual_input_forward.1} parent=1 // pred_check
      _
    $region15: #{dual_input_forward.1} parent=1 // pred_check_branch
      %19 = sbr.rel (0) target = $region17
    $region16: #{dual_input_forward.1} parent=1 // pred_region
      _
    $region17: #{dual_input_forward.1} parent=1 // pred_fallthru
      _
    // Predicated region
    $region18: #{dual_input_forward.1} parent=1 // pred_check
      _
    $region19: #{dual_input_forward.1} parent=1 // pred_check_branch
      %21 = sbr.rel (0) target = $region21
    $region20: #{dual_input_forward.1} parent=1 // pred_region
      _
    $region21: #{dual_input_forward.1} parent=1 // pred_fallthru
      _
    // Predicated region
    $region22: #{dual_input_forward.1} parent=1 // pred_check
      _
    $region23: #{dual_input_forward.1} parent=1 // pred_check_branch
      %23 = sbr.rel (0) target = $region25
    $region24: #{dual_input_forward.1} parent=1 // pred_region
      _
    $region25: #{dual_input_forward.1} parent=1 // pred_fallthru
      _
    %v24 = vld [vmem:[%s0] sm:$0xff]
    %v25 = vld [vmem:[%s2] sm:$0xff]
    %v26 = vld [vmem:[%s2 + $0x8] sm:$0xff]
    %v27 = vld [vmem:[%s2 + $0x10] sm:$0xff]
    %v28 = vld [vmem:[%s2 + $0x18] sm:$0xff]
    %v29 = vld [vmem:[%s3] sm:$0x1]
    %v31 = vlaneseq
    %v32 = vshrl.u32 %v31, 7
    %v33 = vsub.s32 0, %v32
    %v34 = vrot.slane %v29, %v33
    %vm36 = vcmask 130048
    %v38 = vsel %vm36, %v24, 0
    %v41 = vsel %vm36, %v25, 0
    %v44 = vsel %vm36, %v26, 0
    %v47 = vsel %vm36, %v27, 0
    %v50 = vsel %vm36, %v28, 0
    %52 = vmatprep.subr.mxu0 0.0
    %53 = vmatpush1.xpose.msra.mxu0 %v41
    %54 = vmatprep.subr.mxu0 0.0
    %55 = vmatpush1.xpose.msra.mxu0 %v44
    %56 = vmatprep.subr.mxu0 0.0
    %57 = vmatpush1.xpose.msra.mxu0 %v47
    %58 = vmatprep.subr.mxu0 0.0
    %59 = vmatpush1.xpose.msra.mxu0 %v50
    %60 = vmatprep.subr.mxu0 0.0
    %61 = vmatpush1.xpose.msra.mxu0 0.0
    %62 = vmatprep.subr.mxu0 0.0
    %63 = vmatpush1.xpose.msra.mxu0 0.0
    %64 = vmatprep.subr.mxu0 0.0
    %65 = vmatpush1.xpose.msra.mxu0 0.0
    %66 = vmatprep.subr.mxu0 0.0
    %67 = vmatpush1.xpose.msra.mxu0 0.0
    %68 = vmatprep.subr.mxu0 0.0
    %69 = vmatpush1.xpose.msra.mxu0 0.0
    %70 = vmatprep.subr.mxu0 0.0
    %71 = vmatpush1.xpose.msra.mxu0 0.0
    %72 = vmatprep.subr.mxu0 0.0
    %73 = vmatpush1.xpose.msra.mxu0 0.0
    %74 = vmatprep.subr.mxu0 0.0
    %75 = vmatpush1.xpose.msra.mxu0 0.0
    %76 = vmatprep.subr.mxu0 0.0
    %77 = vmatpush1.xpose.msra.mxu0 0.0
    %78 = vmatprep.subr.mxu0 0.0
    %79 = vmatpush1.xpose.msra.mxu0 0.0
    %80 = vmatprep.subr.mxu0 0.0
    %81 = vmatpush1.xpose.msra.mxu0 0.0
    %82 = vmatprep.subr.mxu0 0.0
    %83 = vmatpush1.xpose.msra.mxu0 0.0
    %84 = vmatprep.subr.mxu0 0.0
    %85 = vmatpush1.xpose.msra.mxu0 0.0
    %86 = vmatprep.subr.mxu0 0.0
    %87 = vmatpush1.xpose.msra.mxu0 0.0
    %88 = vmatprep.subr.mxu0 0.0
    %89 = vmatpush1.xpose.msra.mxu0 0.0
    %90 = vmatprep.subr.mxu0 0.0
    %91 = vmatpush1.xpose.msra.mxu0 0.0
    %92 = vmatprep.subr.mxu0 0.0
    %93 = vmatpush1.xpose.msra.mxu0 0.0
    %94 = vmatprep.subr.mxu0 0.0
    %95 = vmatpush1.xpose.msra.mxu0 0.0
    %96 = vmatprep.subr.mxu0 0.0
    %97 = vmatpush1.xpose.msra.mxu0 0.0
    %98 = vmatprep.subr.mxu0 0.0
    %99 = vmatpush1.xpose.msra.mxu0 0.0
    %100 = vmatprep.subr.mxu0 0.0
    %101 = vmatpush1.xpose.msra.mxu0 0.0
    %102 = vmatprep.subr.mxu0 0.0
    %103 = vmatpush1.xpose.msra.mxu0 0.0
    %104 = vmatprep.subr.mxu0 0.0
    %105 = vmatpush1.xpose.msra.mxu0 0.0
    %106 = vmatprep.subr.mxu0 0.0
    %107 = vmatpush1.xpose.msra.mxu0 0.0
    %108 = vmatprep.subr.mxu0 0.0
    %109 = vmatpush1.xpose.msra.mxu0 0.0
    %110 = vmatprep.subr.mxu0 0.0
    %111 = vmatpush1.xpose.msra.mxu0 0.0
    %112 = vmatprep.subr.mxu0 0.0
    %113 = vmatpush1.xpose.msra.mxu0 0.0
    %114 = vmatprep.subr.mxu0 0.0
    %115 = vmatpush1.xpose.msra.mxu0 0.0
    %116 = vmatprep.mubr.f32.mxu0 0.0
    %117 = vmatmul.mubr.f32.gmra.mrb[0].mxu0 %v38
    %v118 = vpop.f32.mrb[0].mxu0
    %v119 = vadd.f32 %v34, %v118
    %v120 = vpop.f32.mrb[0].mxu0
    %121 = vdwg.mxu0
    %v122 = vld [vmem:[%s1] sm:$0xff]
    %v123 = vld [vmem:[%s4] sm:$0xff]
    %v124 = vld [vmem:[%s4 + $0x8] sm:$0xff]
    %v125 = vld [vmem:[%s4 + $0x10] sm:$0xff]
    %v126 = vld [vmem:[%s4 + $0x18] sm:$0xff]
    %v127 = vld [vmem:[%s5] sm:$0x1]
    %v129 = vlaneseq
    %v130 = vshrl.u32 %v129, 7
    %v131 = vsub.s32 0, %v130
    %v132 = vrot.slane %v127, %v131
    %vm134 = vcmask 195584
    %v136 = vsel %vm134, %v122, 0
    %v139 = vsel %vm134, %v123, 0
    %v142 = vsel %vm134, %v124, 0
    %v145 = vsel %vm134, %v125, 0
    %v148 = vsel %vm134, %v126, 0
    %150 = vmatprep.subr.mxu0 0.0
    %151 = vmatpush1.xpose.msra.mxu0 %v139
    %152 = vmatprep.subr.mxu0 0.0
    %153 = vmatpush1.xpose.msra.mxu0 %v142
    %154 = vmatprep.subr.mxu0 0.0
    %155 = vmatpush1.xpose.msra.mxu0 %v145
    %156 = vmatprep.subr.mxu0 0.0
    %157 = vmatpush1.xpose.msra.mxu0 %v148
    %158 = vmatprep.subr.mxu0 0.0
    %159 = vmatpush1.xpose.msra.mxu0 0.0
    %160 = vmatprep.subr.mxu0 0.0
    %161 = vmatpush1.xpose.msra.mxu0 0.0
    %162 = vmatprep.subr.mxu0 0.0
    %163 = vmatpush1.xpose.msra.mxu0 0.0
    %164 = vmatprep.subr.mxu0 0.0
    %165 = vmatpush1.xpose.msra.mxu0 0.0
    %166 = vmatprep.subr.mxu0 0.0
    %167 = vmatpush1.xpose.msra.mxu0 0.0
    %168 = vmatprep.subr.mxu0 0.0
    %169 = vmatpush1.xpose.msra.mxu0 0.0
    %170 = vmatprep.subr.mxu0 0.0
    %171 = vmatpush1.xpose.msra.mxu0 0.0
    %172 = vmatprep.subr.mxu0 0.0
    %173 = vmatpush1.xpose.msra.mxu0 0.0
    %174 = vmatprep.subr.mxu0 0.0
    %175 = vmatpush1.xpose.msra.mxu0 0.0
    %176 = vmatprep.subr.mxu0 0.0
    %177 = vmatpush1.xpose.msra.mxu0 0.0
    %178 = vmatprep.subr.mxu0 0.0
    %179 = vmatpush1.xpose.msra.mxu0 0.0
    %180 = vmatprep.subr.mxu0 0.0
    %181 = vmatpush1.xpose.msra.mxu0 0.0
    %182 = vmatprep.subr.mxu0 0.0
    %183 = vmatpush1.xpose.msra.mxu0 0.0
    %184 = vmatprep.subr.mxu0 0.0
    %185 = vmatpush1.xpose.msra.mxu0 0.0
    %186 = vmatprep.subr.mxu0 0.0
    %187 = vmatpush1.xpose.msra.mxu0 0.0
    %188 = vmatprep.subr.mxu0 0.0
    %189 = vmatpush1.xpose.msra.mxu0 0.0
    %190 = vmatprep.subr.mxu0 0.0
    %191 = vmatpush1.xpose.msra.mxu0 0.0
    %192 = vmatprep.subr.mxu0 0.0
    %193 = vmatpush1.xpose.msra.mxu0 0.0
    %194 = vmatprep.subr.mxu0 0.0
    %195 = vmatpush1.xpose.msra.mxu0 0.0
    %196 = vmatprep.subr.mxu0 0.0
    %197 = vmatpush1.xpose.msra.mxu0 0.0
    %198 = vmatprep.subr.mxu0 0.0
    %199 = vmatpush1.xpose.msra.mxu0 0.0
    %200 = vmatprep.subr.mxu0 0.0
    %201 = vmatpush1.xpose.msra.mxu0 0.0
    %202 = vmatprep.subr.mxu0 0.0
    %203 = vmatpush1.xpose.msra.mxu0 0.0
    %204 = vmatprep.subr.mxu0 0.0
    %205 = vmatpush1.xpose.msra.mxu0 0.0
    %206 = vmatprep.subr.mxu0 0.0
    %207 = vmatpush1.xpose.msra.mxu0 0.0
    %208 = vmatprep.subr.mxu0 0.0
    %209 = vmatpush1.xpose.msra.mxu0 0.0
    %210 = vmatprep.subr.mxu0 0.0
    %211 = vmatpush1.xpose.msra.mxu0 0.0
    %212 = vmatprep.subr.mxu0 0.0
    %213 = vmatpush1.xpose.msra.mxu0 0.0
    %214 = vmatprep.mubr.f32.mxu0 0.0
    %215 = vmatmul.mubr.f32.gmra.mrb[0].mxu0 %v136
    %v216 = vpop.f32.mrb[0].mxu0
    %v217 = vadd.f32 %v132, %v216
    %v218 = vpop.f32.mrb[0].mxu0
    %219 = vdwg.mxu0
    %v220 = vmul.f32 %v119, %v217
    %vm221 = vcmask 261120
    %v222 = vsel %vm221, %v220, 0.0
    %223 = vadd.xlane.f32.xlu0 %v222
    %v224 = vpop.xlane.xlu0 %223
    %v225 = vmul.f32 %v119, %v119
    %v226 = vsel %vm221, %v225, 0.0
    %227 = vadd.xlane.f32.xlu0 %v226
    %v228 = vpop.xlane.xlu0 %227
    %v229 = vmul.f32 %v217, %v217
    %v230 = vsel %vm221, %v229, 0.0
    %231 = vadd.xlane.f32.xlu0 %v230
    %v232 = vpop.xlane.xlu0 %231
    %v233 = vmax.f32 %v228, 1e-16
    %v234 = vmax.f32 %v232, 1e-16
    %v235 = vmul.f32 %v233, %v234
    %v236 = vrsqrt.pop %v235
    %v237 = vmul.f32 %v224, %v236
    %v239 = vlaneseq
    %v240 = vand.u32 %v239, 127
    %v241 = vlaneseq
    %v242 = vshrl.u32 %v241, 7
    %v243 = vsub.s32 %v240, %v242
    %v244 = vrot.slane %v237, %v243
    %vm246 = vcmask 57344
    %247 = vst.msk [vmem:[#allocation2] sm:$0x1] %vm246, %v244
    // Predicated region
    $region26: #{dual_input_forward.1} parent=1 // pred_check
      _
    $region27: #{dual_input_forward.1} parent=1 // pred_check_branch
      %249 = sbr.rel (0) target = $region29
    $region28: #{dual_input_forward.1} parent=1 // pred_region
      %s251 = ssub.s32 16, 16
      %252 = vsyncadd [#allocation3], %s251
      %s254 = sshll.u32 [#allocation2], 4
      %s255 = int_to_ptr.vmem [resolvable:$true] %s254
      %257 = dma.vmem_to_hbm [thread:$0]  %s255, 16, %s6, [#allocation3]
    $region29: #{dual_input_forward.1} parent=1 // pred_fallthru
      _
    // Predicated region
    $region30: #{dual_input_forward.1} parent=1 // pred_check
      _
    $region31: #{dual_input_forward.1} parent=1 // pred_check_branch
      %259 = sbr.rel (0) target = $region33
    $region32: #{dual_input_forward.1} parent=1 // pred_region
      %260 = dma.done [#allocation3], 16
    $region33: #{dual_input_forward.1} parent=1 // pred_fallthru
      _
    %261 = vsyncpa [#allocation3], 1

</llo_original>
